<compile_context>
chip_gen: v6e
topology: v6e:2x2x1
jax: 0.10.0
libtpu: 0.0.40
codegen_flags: <defaults>
</compile_context>

<pallas_src>
import jax
import jax.numpy as jnp
from jax.experimental import pallas as pl
from jax.experimental.pallas import tpu as pltpu


# ---------------------------------------------------------------------------
# Kernels
# ---------------------------------------------------------------------------
def _logreg_kernel(x_ref, w_ref, b_ref, o_ref):
    # x: [TM, IN], w: [IN, OUT_E], b: [1, OUT_E]  ->  o: [TM, OUT_E]
    lin = jax.lax.dot_general(
        x_ref[...], w_ref[...],
        dimension_numbers=(((1,), (0,)), ((), ())),   # canonical X @ W
        preferred_element_type=jnp.float32,
    ) + b_ref[...]
    o_ref[...] = jax.nn.sigmoid(lin).astype(o_ref.dtype)


def _logreg_kernel_ktiled(x_ref, w_ref, b_ref, o_ref, acc_ref):
    # grid = (batch_tiles, k_tiles); accumulate partial products over K.
    k = pl.program_id(1)

    @pl.when(k == 0)
    def _():
        acc_ref[...] = jnp.zeros_like(acc_ref)

    acc_ref[...] += jax.lax.dot_general(
        x_ref[...], w_ref[...],
        dimension_numbers=(((1,), (0,)), ((), ())),
        preferred_element_type=jnp.float32,
    )

    @pl.when(k == pl.num_programs(1) - 1)
    def _():
        o_ref[...] = jax.nn.sigmoid(acc_ref[...] + b_ref[...]).astype(o_ref.dtype)


# ---------------------------------------------------------------------------
# Helpers
# ---------------------------------------------------------------------------
def _round_up(x, m):
    return ((x + m - 1) // m) * m


def _usable_vmem_bytes():
    """~85% of physical VMEM (leaves headroom for compiler scratch / sems)."""
    phys = None
    try:
        phys = int(pltpu.get_tpu_info().vmem_capacity_bytes)
    except Exception:
        phys = None
    if phys is None:
        try:
            kind = jax.devices()[0].device_kind.lower()
        except Exception:
            kind = ""
        phys = 64 * 2**20 if "v7" in kind else 128 * 2**20   # v7x: 64 MiB/TC
    return int(phys * 0.85)


def prepare_params(w, b):
    """One-time (init-time) parameter prep.

    w: [OUT, IN] (PyTorch layout), b: [OUT]
    Returns (w_t [IN, OUT_E], b_row [1, OUT_E], out_size).
    OUT_E == OUT for small OUT (<128); padded to a multiple of 128 otherwise.
    """
    OUT, IN = w.shape
    assert b.shape == (OUT,)
    out_e = _round_up(OUT, 128) if OUT >= 128 else OUT
    w_t = jnp.asarray(w, jnp.float32).T                    # [IN, OUT]
    b = jnp.asarray(b, jnp.float32)
    if out_e != OUT:
        w_t = jnp.pad(w_t, ((0, 0), (0, out_e - OUT)))
        b = jnp.pad(b, ((0, out_e - OUT),))
    return w_t, b.reshape(1, out_e), OUT


def _plan_tiles(B, IN, OUT_E, budget):
    """Pick (tm, tk, nk) from the VMEM budget."""
    elt = 4  # f32
    bias_bytes = 2 * elt * OUT_E
    w_res = 2 * elt * IN * OUT_E                     # double-buffered resident W
    if w_res <= budget // 2:
        tk, nk = IN, 1
        w_bytes = w_res
        per_row = elt * (2 * IN + 2 * OUT_E)          # X dbuf + out dbuf
    else:
        # K-tiled: largest multiple of 128 dividing IN within ~1/4 of budget.
        tk_budget = max(128, (budget // 4) // (2 * elt * OUT_E))
        tk = None
        c = max(128, (tk_budget // 128) * 128)
        while c >= 128:
            if IN % c == 0:
                tk = c
                break
            c -= 128
        if tk is None:
            # TODO(synk): pad IN at init time to enable K-tiling for odd IN.
            raise ValueError("in_size too large for resident W and not a "
                             "multiple of 128; unsupported shape.")
        nk = IN // tk
        w_bytes = 2 * elt * tk * OUT_E
        per_row = elt * (2 * tk + 2 * OUT_E + OUT_E)  # + f32 accumulator

    avail = budget - w_bytes - bias_bytes
    tm_vmem = max(8, (avail // per_row) // 8 * 8)
    if B <= 8:
        tm = B
    else:
        tm_mc = _round_up(-(-B // 2), 8)              # >= 2 grid steps (v7x 2 TCs)
        tm = max(8, min(tm_vmem, tm_mc))

    need = w_bytes + bias_bytes + tm * per_row
    if need > budget:
        # TODO(synk): add OUT/N tiling axis for very large out_size.
        raise ValueError("Shapes exceed VMEM budget even at minimum tile.")
    return tm, tk, nk


# ---------------------------------------------------------------------------
# Forward
# ---------------------------------------------------------------------------
def logistic_regression_forward(x, w_t, b_row, out_size, *, plan_vmem_bytes=None):
    """x: [B, IN] f32; w_t: [IN, OUT_E]; b_row: [1, OUT_E] (from prepare_params)."""
    B, IN = x.shape
    IN_w, OUT_E = w_t.shape
    assert IN == IN_w and b_row.shape == (1, OUT_E)

    vmem_limit = _usable_vmem_bytes()
    budget = plan_vmem_bytes if plan_vmem_bytes is not None else vmem_limit
    tm, tk, nk = _plan_tiles(B, IN, OUT_E, budget)

    if nk == 1:
        out = pl.pallas_call(
            _logreg_kernel,
            out_shape=jax.ShapeDtypeStruct((B, OUT_E), jnp.float32),
            grid_spec=pltpu.PrefetchScalarGridSpec(
                num_scalar_prefetch=0,
                grid=(pl.cdiv(B, tm),),
                in_specs=[
                    pl.BlockSpec((tm, IN), lambda i: (i, 0)),      # X: streamed
                    pl.BlockSpec((IN, OUT_E), lambda i: (0, 0)),   # W: resident
                    pl.BlockSpec((1, OUT_E), lambda i: (0, 0)),    # b: resident
                ],
                out_specs=pl.BlockSpec((tm, OUT_E), lambda i: (i, 0)),
            ),
            compiler_params=pltpu.CompilerParams(
                dimension_semantics=("parallel",),
                vmem_limit_bytes=vmem_limit,
            ),
        )(x, w_t, b_row)
    else:
        out = pl.pallas_call(
            _logreg_kernel_ktiled,
            out_shape=jax.ShapeDtypeStruct((B, OUT_E), jnp.float32),
            grid_spec=pltpu.PrefetchScalarGridSpec(
                num_scalar_prefetch=0,
                grid=(pl.cdiv(B, tm), nk),
                in_specs=[
                    pl.BlockSpec((tm, tk), lambda i, k: (i, k)),
                    pl.BlockSpec((tk, OUT_E), lambda i, k: (k, 0)),
                    pl.BlockSpec((1, OUT_E), lambda i, k: (0, 0)),
                ],
                out_specs=pl.BlockSpec((tm, OUT_E), lambda i, k: (i, 0)),
                scratch_shapes=[pltpu.VMEM((tm, OUT_E), jnp.float32)],
            ),
            compiler_params=pltpu.CompilerParams(
                dimension_semantics=("parallel", "arbitrary"),
                vmem_limit_bytes=vmem_limit,
            ),
        )(x, w_t, b_row)

    # For OUT >= 128 padded layouts a real model would keep the OUT_E-wide
    # output as its native layout; we slice here only to match the PyTorch API.
    return out if OUT_E == out_size else out[:, :out_size]


# ---------------------------------------------------------------------------
# Self-test
# ---------------------------------------------------------------------------
if __name__ == "__main__":
    key = jax.random.PRNGKey(0)

    def run_case(batch, in_size, out_size, k, plan_vmem_bytes=None):
        kx, kw, kb = jax.random.split(k, 3)
        x = jax.random.normal(kx, (batch, in_size), dtype=jnp.float32)
        # torch.nn.Linear default init: U(-1/sqrt(in), 1/sqrt(in))
        bound = 1.0 / (in_size ** 0.5)
        w = jax.random.uniform(kw, (out_size, in_size), jnp.float32, -bound, bound)
        b = jax.random.uniform(kb, (out_size,), jnp.float32, -bound, bound)

        w_t, b_row, out_sz = prepare_params(w, b)           # one-time init prep
        out = jax.block_until_ready(
            logistic_regression_forward(x, w_t, b_row, out_sz,
                                        plan_vmem_bytes=plan_vmem_bytes))
        ref = jax.nn.sigmoid(x @ w.T + b)
        assert out.shape == (batch, out_size)
        assert jnp.allclose(out, ref, atol=1e-5, rtol=1e-5)

    k1, k2, k3, k4 = jax.random.split(key, 4)
    # Small shape consistent with the module: batch=8, in_size=32, out_size=16.
    run_case(8, 32, 16, k1)
    # Larger batch: tiled, pipelined, 2-way parallel batch grid.
    run_case(1024, 256, 16, k2)
    # out_size >= 128 and not a lane multiple: exercises the padded-W path.
    run_case(64, 128, 200, k3)
    # Force the K-tiled accumulator path with an artificially small plan budget.
    run_case(256, 1024, 16, k4, plan_vmem_bytes=128 * 1024)

    print("KERNEL_OK")
</pallas_src>

<mosaic_0001>
module attributes {stable_mosaic.version = 11 : i64} {
  func.func @_logreg_kernel(%arg0: i32, %arg1: memref<8x32xf32, #tpu.memory_space<vmem>>, %arg2: memref<32x16xf32, #tpu.memory_space<vmem>>, %arg3: memref<1x16xf32, #tpu.memory_space<vmem>>, %arg4: memref<8x16xf32, #tpu.memory_space<vmem>>) attributes {dimension_semantics = [#tpu.dimension_semantics<parallel>], iteration_bounds = array<i64: 1>, scalar_prefetch = 0 : i64, scratch_operands = 0 : i64, tpu.core_type = #tpu.core_type<tc>, window_params = [{transform_indices = @transform_0, window_bounds = array<i64: 8, 32>}, {pipeline_mode = #tpu.pipeline_mode<synchronous>, transform_indices = @transform_1, window_bounds = array<i64: 32, 16>}, {pipeline_mode = #tpu.pipeline_mode<synchronous>, transform_indices = @transform_2, window_bounds = array<i64: 1, 16>}, {transform_indices = @transform_3, window_bounds = array<i64: 8, 16>}]} {
    %c0 = arith.constant 0 : index
    %c0_0 = arith.constant 0 : index
    %0 = vector.load %arg1[%c0, %c0_0] : memref<8x32xf32, #tpu.memory_space<vmem>>, vector<8x32xf32>
    %c0_1 = arith.constant 0 : index
    %c0_2 = arith.constant 0 : index
    %1 = vector.load %arg2[%c0_1, %c0_2] : memref<32x16xf32, #tpu.memory_space<vmem>>, vector<32x16xf32>
    %cst = arith.constant dense<0.000000e+00> : vector<8x16xf32>
    %2 = tpu.matmul %0, %1, %cst {dimension_numbers = #tpu.dot_dimension_numbers<[1], [0], [0], [1], [0, 0, 1, 1], [], []>} : vector<8x32xf32>, vector<32x16xf32>, vector<8x16xf32> -> vector<8x16xf32>
    %c0_3 = arith.constant 0 : index
    %c0_4 = arith.constant 0 : index
    %3 = vector.load %arg3[%c0_3, %c0_4] : memref<1x16xf32, #tpu.memory_space<vmem>>, vector<1x16xf32>
    %4 = vector.broadcast %3 : vector<1x16xf32> to vector<8x16xf32>
    %5 = arith.addf %2, %4 : vector<8x16xf32>
    %6 = arith.negf %5 : vector<8x16xf32>
    %7 = math.exp %6 : vector<8x16xf32>
    %cst_5 = arith.constant 1.000000e+00 : f32
    %8 = vector.broadcast %cst_5 : f32 to vector<8x16xf32>
    %9 = arith.addf %8, %7 : vector<8x16xf32>
    %10 = arith.divf %8, %9 : vector<8x16xf32>
    %c0_6 = arith.constant 0 : index
    %c0_7 = arith.constant 0 : index
    %11 = vector.load %arg4[%c0_6, %c0_7] : memref<8x16xf32, #tpu.memory_space<vmem>>, vector<8x16xf32>
    tpu.vector_store %arg4[%c0_6, %c0_7], %10 {strides = array<i32>} : memref<8x16xf32, #tpu.memory_space<vmem>>, vector<8x16xf32>,
    return
  }
  func.func @transform_0(%arg0: i32) -> (i32, i32) {
    %c0_i32 = arith.constant 0 : i32
    %c0_i32_0 = arith.constant 0 : i32
    return %arg0, %c0_i32 : i32, i32
  }
  func.func @transform_1(%arg0: i32) -> (i32, i32) {
    %c0_i32 = arith.constant 0 : i32
    %c0_i32_0 = arith.constant 0 : i32
    %c0_i32_1 = arith.constant 0 : i32
    return %c0_i32, %c0_i32_0 : i32, i32
  }
  func.func @transform_2(%arg0: i32) -> (i32, i32) {
    %c0_i32 = arith.constant 0 : i32
    %c0_i32_0 = arith.constant 0 : i32
    %c0_i32_1 = arith.constant 0 : i32
    return %c0_i32, %c0_i32_0 : i32, i32
  }
  func.func @transform_3(%arg0: i32) -> (i32, i32) {
    %c0_i32 = arith.constant 0 : i32
    %c0_i32_0 = arith.constant 0 : i32
    return %arg0, %c0_i32 : i32, i32
  }
}

</mosaic_0001>

<llo_original>
// kernel: tpu_custom_call.1
$region0: #{tpu_custom_call.1}
  #allocation0 [shape = 'u32[]', space=smem, size = 0x4, offset = 0x4, fixed_abs, tag = 'smem constant byte address 0x4 - core index']
  #allocation1 [shape = 'u32[144,128]{1,0:T(1,128)}', space=vmem, size = 0x12000, scoped, tag = 'internal scratch']
  %s0 = inlined_call_operand.vmem [shape: f32[8,32], index: 0, kind: input, shape index: {}]
  %s1 = inlined_call_operand.vmem [shape: f32[32,16], index: 1, kind: input, shape index: {}]
  %s2 = inlined_call_operand.vmem [shape: f32[1,16], index: 2, kind: input, shape index: {}]
  %s3 = inlined_call_operand.hbm [shape: f32[8,16], index: 3, kind: output, shape index: {}]
  %s4 = sld [smem:[#allocation0]]
  $region22: #{tpu_custom_call.1} parent=0
    _
  %s6 = ssub.s32 1, %s4
  %s7 = scalar_select 0, %s6, %s4
  $region1: #{tpu_custom_call.1} parent=0
    #allocation2 [shape = 'u8[4096]{0}', space=vmem, size = 0x1000, scoped, tag = 'output window, operand 0, single buffered']
    #allocation3 [shape = 's32[1]{0}', space=sflag, size = 0x4, scoped, tag = 'scoped memory for tpu_custom_call.1']
    %8 = vsyncpa [#allocation3], 0
    // Predicated region
    $region2: #{tpu_custom_call.1} parent=1 // pred_check
      _
    $region3: #{tpu_custom_call.1} parent=1 // pred_check_branch
      %10 = sbr.rel (0) target = $region5
    $region4: #{tpu_custom_call.1} parent=1 // pred_region
      _
    $region5: #{tpu_custom_call.1} parent=1 // pred_fallthru
      _
    // Predicated region
    $region6: #{tpu_custom_call.1} parent=1 // pred_check
      _
    $region7: #{tpu_custom_call.1} parent=1 // pred_check_branch
      %12 = sbr.rel (0) target = $region9
    $region8: #{tpu_custom_call.1} parent=1 // pred_region
      _
    $region9: #{tpu_custom_call.1} parent=1 // pred_fallthru
      _
    // Predicated region
    $region10: #{tpu_custom_call.1} parent=1 // pred_check
      _
    $region11: #{tpu_custom_call.1} parent=1 // pred_check_branch
      %14 = sbr.rel (0) target = $region13
    $region12: #{tpu_custom_call.1} parent=1 // pred_region
      _
    $region13: #{tpu_custom_call.1} parent=1 // pred_fallthru
      _
    %v15 = vld [vmem:[%s0] sm:$0xff]
    %v16 = vld [vmem:[%s1] sm:$0xff]
    %v17 = vld [vmem:[%s1 + $0x8] sm:$0xff]
    %v18 = vld [vmem:[%s1 + $0x10] sm:$0xff]
    %v19 = vld [vmem:[%s1 + $0x18] sm:$0xff]
    %v20 = vld [vmem:[%s2] sm:$0x1]
    %v22 = vlaneseq
    %v23 = vshrl.u32 %v22, 7
    %v24 = vsub.s32 0, %v23
    %v25 = vrot.slane %v20, %v24
    %vm27 = vcmask 261120
    %v29 = vsel %vm27, %v15, 0
    %31 = vmatprep.subr.mxu0 0.0
    %32 = vmatpush1.msra.mxu0 0.0
    %33 = vmatprep.subr.mxu0 0.0
    %34 = vmatpush1.msra.mxu0 0.0
    %35 = vmatprep.subr.mxu0 0.0
    %36 = vmatpush1.msra.mxu0 0.0
    %37 = vmatprep.subr.mxu0 0.0
    %38 = vmatpush1.msra.mxu0 0.0
    %39 = vmatprep.subr.mxu0 0.0
    %40 = vmatpush1.msra.mxu0 0.0
    %41 = vmatprep.subr.mxu0 0.0
    %42 = vmatpush1.msra.mxu0 0.0
    %43 = vmatprep.subr.mxu0 0.0
    %44 = vmatpush1.msra.mxu0 0.0
    %45 = vmatprep.subr.mxu0 0.0
    %46 = vmatpush1.msra.mxu0 0.0
    %47 = vmatprep.subr.mxu0 0.0
    %48 = vmatpush1.msra.mxu0 0.0
    %49 = vmatprep.subr.mxu0 0.0
    %50 = vmatpush1.msra.mxu0 0.0
    %51 = vmatprep.subr.mxu0 0.0
    %52 = vmatpush1.msra.mxu0 0.0
    %53 = vmatprep.subr.mxu0 0.0
    %54 = vmatpush1.msra.mxu0 0.0
    %55 = vmatprep.subr.mxu0 0.0
    %56 = vmatpush1.msra.mxu0 %v19
    %57 = vmatprep.subr.mxu0 0.0
    %58 = vmatpush1.msra.mxu0 %v18
    %59 = vmatprep.subr.mxu0 0.0
    %60 = vmatpush1.msra.mxu0 %v17
    %61 = vmatprep.subr.mxu0 0.0
    %62 = vmatpush1.msra.mxu0 %v16
    %63 = vmatprep.subr.mxu0 0.0
    %64 = vmatpush2.msra.mxu0 0.0
    %65 = vmatprep.subr.mxu0 0.0
    %66 = vmatpush2.msra.mxu0 0.0
    %67 = vmatprep.subr.mxu0 0.0
    %68 = vmatpush2.msra.mxu0 0.0
    %69 = vmatprep.subr.mxu0 0.0
    %70 = vmatpush2.msra.mxu0 0.0
    %71 = vmatprep.subr.mxu0 0.0
    %72 = vmatpush2.msra.mxu0 0.0
    %73 = vmatprep.subr.mxu0 0.0
    %74 = vmatpush2.msra.mxu0 0.0
    %75 = vmatprep.subr.mxu0 0.0
    %76 = vmatpush2.msra.mxu0 0.0
    %77 = vmatprep.subr.mxu0 0.0
    %78 = vmatpush2.msra.mxu0 0.0
    %79 = vmatprep.subr.mxu0 0.0
    %80 = vmatpush2.msra.mxu0 0.0
    %81 = vmatprep.subr.mxu0 0.0
    %82 = vmatpush2.msra.mxu0 0.0
    %83 = vmatprep.subr.mxu0 0.0
    %84 = vmatpush2.msra.mxu0 0.0
    %85 = vmatprep.subr.mxu0 0.0
    %86 = vmatpush2.msra.mxu0 0.0
    %87 = vmatprep.subr.mxu0 0.0
    %88 = vmatpush2.msra.mxu0 0.0
    %89 = vmatprep.subr.mxu0 0.0
    %90 = vmatpush2.msra.mxu0 0.0
    %91 = vmatprep.subr.mxu0 0.0
    %92 = vmatpush2.msra.mxu0 0.0
    %93 = vmatprep.subr.mxu0 0.0
    %94 = vmatpush2.msra.mxu0 0.0
    %95 = vmatprep.mubr.f32.mxu0 0.0
    %96 = vmatmul.mubr.f32.gmra.mxu0 %v29
    %v97 = vpop.f32.mrf.mxu0
    %v98 = vadd.f32 %v25, %v97
    %v99 = vpop.f32.mrf.mxu0
    %100 = vdwg.mxu0
    %v101 = vxor.u32 %v98, 2147483648
    %v102 = vmul.f32 %v101, 1.442695
    %v103 = vpow.pop %v102
    %v104 = vadd.f32 %v103, 1.0
    %v105 = vrcp.pop %v104
    %v106 = vmul.f32 1.0, %v105
    %vm107 = vcmask 130048
    %108 = vst.msk [vmem:[#allocation2] sm:$0xff] %vm107, %v106
    // Predicated region
    $region14: #{tpu_custom_call.1} parent=1 // pred_check
      _
    $region15: #{tpu_custom_call.1} parent=1 // pred_check_branch
      %110 = sbr.rel (0) target = $region17
    $region16: #{tpu_custom_call.1} parent=1 // pred_region
      %s112 = ssub.s32 128, 128
      %113 = vsyncadd [#allocation3], %s112
      %s115 = sshll.u32 [#allocation2], 4
      %s116 = int_to_ptr.vmem [resolvable:$true] %s115
      %118 = dma.vmem_to_hbm [thread:$0]  %s116, 128, %s3, [#allocation3]
    $region17: #{tpu_custom_call.1} parent=1 // pred_fallthru
      _
    // Predicated region
    $region18: #{tpu_custom_call.1} parent=1 // pred_check
      _
    $region19: #{tpu_custom_call.1} parent=1 // pred_check_branch
      %120 = sbr.rel (0) target = $region21
    $region20: #{tpu_custom_call.1} parent=1 // pred_region
      %121 = dma.done [#allocation3], 128
    $region21: #{tpu_custom_call.1} parent=1 // pred_fallthru
      _
    %122 = vsyncpa [#allocation3], 1

</llo_original>
